<compile_context>
chip_gen: v5e
topology: v5e:2x2
jax: 0.10.0
libtpu: 0.0.40
codegen_flags: <defaults>
</compile_context>

<pallas_src>
import functools
import math

import jax
import jax.numpy as jnp
from jax import lax
from jax.experimental import pallas as pl
from jax.experimental.pallas import tpu as pltpu


def _swiglu_kernel(x_ref, w1_ref, w3_ref, w2_ref, o_ref, *scratch):
    # x_ref:   (tm, d_model)          activation tile
    # w1_ref:  (tk_ff, d_model)       W1 tile (rows = d_ff slice), native layout
    # w3_ref:  (tk_ff, d_model)       W3 tile, native layout
    # w2_ref:  (d_model, tk_ff)       W2 tile (cols = d_ff slice), native layout
    # o_ref:   (tm, d_model)          output tile (resident across the k axis)
    # scratch: optional (tm, d_model) f32 accumulator (omitted when o_ref is f32)
    acc_ref = scratch[0] if scratch else o_ref
    k = pl.program_id(1)

    @pl.when(k == 0)
    def _():
        acc_ref[...] = jnp.zeros_like(acc_ref)

    # Contract the last dim of both operands (i.e. x @ W^T) -> MXU, f32 accumulation.
    dn = (((1,), (1,)), ((), ()))
    x = x_ref[...]
    h1 = lax.dot_general(x, w1_ref[...], dn, preferred_element_type=jnp.float32)
    h3 = lax.dot_general(x, w3_ref[...], dn, preferred_element_type=jnp.float32)
    # Gate math in f32 (VPU/EUP), cast back to the activation dtype for the W2 MXU pass.
    g = (h1 * jax.nn.sigmoid(h1) * h3).astype(x_ref.dtype)
    acc_ref[...] += lax.dot_general(g, w2_ref[...], dn,
                                    preferred_element_type=jnp.float32)

    if scratch:  # separate f32 accumulator -> cast + store on the last reduction step
        @pl.when(k == pl.num_programs(1) - 1)
        def _():
            o_ref[...] = acc_ref[...].astype(o_ref.dtype)


def _round_up(a, b):
    return (a + b - 1) // b * b


def _vmem_capacity_bytes():
    try:
        info = pltpu.get_tpu_info()
        cap = int(getattr(info, "vmem_capacity_bytes", 0))
        if cap > 0:
            return cap
    except Exception:
        pass
    return 64 * 1024 * 1024  # conservative (v7x-sized) fallback; safe everywhere


@functools.partial(jax.jit, static_argnames=("tm", "tk_ff"))
def swiglu(x, w1, w2, w3, *, tm=512, tk_ff=512):
    """x: [..., d_model]; w1, w3: [d_ff, d_model]; w2: [d_model, d_ff]."""
    d_model = x.shape[-1]
    d_ff = w1.shape[0]
    lead = x.shape[:-1]
    n = math.prod(lead) if lead else 1
    x2 = x.reshape(n, d_model)

    act_bytes = jnp.dtype(x.dtype).itemsize
    w_bytes = jnp.dtype(w1.dtype).itemsize
    sub = {4: 8, 2: 16, 1: 32}.get(act_bytes, 8)  # sublane granularity per dtype

    # ---- generation-aware VMEM budget (v5e/v6e: 128 MiB, v7x: 64 MiB) ----
    vmem_cap = _vmem_capacity_bytes()
    budget = int(vmem_cap * 0.85)
    small_vmem = vmem_cap <= 80 * 1024 * 1024  # v7x-like: 64 MiB VMEM, 2 TensorCores

    tm_req = min(tm, 512) if small_vmem else tm
    tk_req = min(tk_ff, 256) if small_vmem else tk_ff

    # f32 outputs accumulate directly into o_ref (resident across k): no scratch needed.
    out_is_acc = jnp.dtype(x.dtype) == jnp.dtype(jnp.float32)

    # ---- token tile ----
    if n <= tm_req:
        tm_eff = n
        if small_vmem and n >= 2 * sub:
            # Give the second TensorCore work on decode-ish shapes: >=2 token blocks.
            tm_eff = _round_up(pl.cdiv(n, 2), sub)
    else:
        # Multiples of 256 (MXU is 2x256^2 on v6e/v7x), else sublane-aligned.
        tm_eff = (tm_req // 256) * 256 if tm_req >= 256 else max(sub, (tm_req // sub) * sub)

    # ---- d_ff tile: prefer a 128-multiple divisor of d_ff (no per-call weight pad) ----
    d_ff_p = d_ff
    pad_needed = 0
    if d_ff <= tk_req:
        tk_eff = d_ff
    else:
        tk_base = max(128, (tk_req // 128) * 128)
        tk_eff = None
        for cand in range(tk_base, 127, -128):
            if d_ff % cand == 0:
                tk_eff = cand
                break
        if tk_eff is None:
            # TODO(synk): pad once outside jit (or mask the ragged tail in-kernel) to
            # avoid re-materializing padded weight copies in HBM on every call.
            tk_eff = tk_base
            d_ff_p = _round_up(d_ff, tk_eff)
            pad_needed = d_ff_p - d_ff

    # ---- shrink the plan until it fits the VMEM budget ----
    def _vmem_est(tm_e, tk_e):
        acc_b = 0 if out_is_acc else tm_e * d_model * 4
        return (2 * 2 * tm_e * d_model * act_bytes     # x + out blocks, double-buffered
                + 2 * 3 * tk_e * d_model * w_bytes     # W1/W3/W2 tiles, double-buffered
                + acc_b                                # f32 accumulator scratch (if any)
                + 3 * tm_e * tk_e * 4)                 # h1/h3/g f32 intermediates

    while _vmem_est(tm_eff, tk_eff) > budget:
        if tm_eff > 256:
            tm_eff = max(256, _round_up(tm_eff // 2, 256))
        elif tm_eff > sub:
            tm_eff = max(sub, _round_up(tm_eff // 2, sub))
        elif tk_eff > 128:
            new_tk = tk_eff
            for cand in range((tk_eff // 2) // 128 * 128, 127, -128):
                if d_ff_p % cand == 0:
                    new_tk = cand
                    break
            if new_tk == tk_eff:
                break
            tk_eff = new_tk
        else:
            break

    if pad_needed:
        w1 = jnp.pad(w1, ((0, pad_needed), (0, 0)))
        w3 = jnp.pad(w3, ((0, pad_needed), (0, 0)))
        w2 = jnp.pad(w2, ((0, 0), (0, pad_needed)))

    nk = d_ff_p // tk_eff
    n_token_tiles = pl.cdiv(n, tm_eff)
    grid = (n_token_tiles, nk)

    # Serpentine d_ff ordering: even token tiles ascend k, odd ones descend, so the
    # weight blocks already in VMEM at an i-boundary are reused (sum is commutative).
    def _snake(i, k):
        return k + (i % 2) * (nk - 1 - 2 * k)

    vmem_est = _vmem_est(tm_eff, tk_eff)
    vmem_limit = int(min(max(int(1.3 * vmem_est), 32 * 1024 * 1024), budget))

    cost = pl.CostEstimate(
        flops=6 * n * d_model * d_ff,
        transcendentals=n * d_ff,
        # Activations once; weights are re-streamed once per token tile.
        bytes_accessed=(2 * n * d_model * act_bytes
                        + n_token_tiles * 3 * d_model * d_ff_p * w_bytes),
    )

    scratch_shapes = [] if out_is_acc else [pltpu.VMEM((tm_eff, d_model), jnp.float32)]

    out = pl.pallas_call(
        _swiglu_kernel,
        out_shape=jax.ShapeDtypeStruct((n, d_model), x.dtype),
        grid_spec=pltpu.PrefetchScalarGridSpec(
            num_scalar_prefetch=0,
            grid=grid,
            in_specs=[
                pl.BlockSpec((tm_eff, d_model), lambda i, k: (i, 0)),        # x
                pl.BlockSpec((tk_eff, d_model), lambda i, k: (_snake(i, k), 0)),  # W1
                pl.BlockSpec((tk_eff, d_model), lambda i, k: (_snake(i, k), 0)),  # W3
                pl.BlockSpec((d_model, tk_eff), lambda i, k: (0, _snake(i, k))),  # W2
            ],
            out_specs=pl.BlockSpec((tm_eff, d_model), lambda i, k: (i, 0)),
            scratch_shapes=scratch_shapes,
        ),
        compiler_params=pltpu.CompilerParams(
            dimension_semantics=("parallel", "arbitrary"),
            vmem_limit_bytes=vmem_limit,
        ),
        cost_estimate=cost,
    )(x2, w1, w3, w2)
    return out.reshape(*lead, d_model)


def trunc_normal(key, shape, std, dtype=jnp.float32):
    # Matches nn.init.trunc_normal_(mean=0, std=std, a=-3*std, b=3*std)
    return (std * jax.random.truncated_normal(key, -3.0, 3.0, shape)).astype(dtype)


def swiglu_ref(x, w1, w2, w3):
    xf = x.astype(jnp.float32)
    h1 = jnp.einsum("...d,fd->...f", xf, w1.astype(jnp.float32))
    h3 = jnp.einsum("...d,fd->...f", xf, w3.astype(jnp.float32))
    g = h1 * jax.nn.sigmoid(h1) * h3
    return jnp.einsum("...f,df->...d", g, w2.astype(jnp.float32))


if __name__ == "__main__":
    batch, seq = 2, 8
    d_model, d_ff = 128, 256

    key = jax.random.PRNGKey(0)
    kx, k1, k2, k3 = jax.random.split(key, 4)

    x = jax.random.normal(kx, (batch, seq, d_model), dtype=jnp.float32)

    std_1 = math.sqrt(2.0 / (d_model + d_ff))
    std_2 = math.sqrt(2.0 / (d_ff + d_model))
    w1 = trunc_normal(k1, (d_ff, d_model), std_1)   # Linear(d_model -> d_ff)
    w3 = trunc_normal(k3, (d_ff, d_model), std_1)   # Linear(d_model -> d_ff)
    w2 = trunc_normal(k2, (d_model, d_ff), std_2)   # Linear(d_ff -> d_model)

    ref = swiglu_ref(x, w1, w2, w3)

    # 1) Default tile plan, f32 end-to-end (accumulates directly into o_ref).
    out = jax.block_until_ready(swiglu(x, w1, w2, w3))
    assert out.shape == (batch, seq, d_model)
    assert jnp.allclose(out, ref, atol=1e-4, rtol=1e-4), "f32 mismatch vs reference"

    # 2) Small tiles: exercises the token grid axis, the d_ff reduction/accumulator,
    #    and the serpentine weight ordering (odd token tiles walk k in reverse).
    out_tiled = jax.block_until_ready(swiglu(x, w1, w2, w3, tm=8, tk_ff=128))
    assert jnp.allclose(out_tiled, ref, atol=1e-4, rtol=1e-4), "tiled mismatch vs reference"

    # 3) bf16 activations + weights: native bf16 MXU operands, f32 gate + f32 scratch acc.
    out_bf16 = jax.block_until_ready(
        swiglu(x.astype(jnp.bfloat16), w1.astype(jnp.bfloat16),
               w2.astype(jnp.bfloat16), w3.astype(jnp.bfloat16)))
    assert jnp.allclose(out_bf16.astype(jnp.float32), ref, atol=3e-2, rtol=3e-2), \
        "bf16 mismatch vs reference"

    print("KERNEL_OK")
</pallas_src>

<mosaic_0001>
module attributes {stable_mosaic.version = 11 : i64} {
  func.func @_swiglu_kernel(%arg0: i32, %arg1: i32, %arg2: memref<8x128xf32, #tpu.memory_space<vmem>>, %arg3: memref<256x128xf32, #tpu.memory_space<vmem>>, %arg4: memref<256x128xf32, #tpu.memory_space<vmem>>, %arg5: memref<128x256xf32, #tpu.memory_space<vmem>>, %arg6: memref<8x128xf32, #tpu.memory_space<vmem>>) attributes {dimension_semantics = [#tpu.dimension_semantics<parallel>, #tpu.dimension_semantics<arbitrary>], iteration_bounds = array<i64: 2, 1>, scalar_prefetch = 0 : i64, scratch_operands = 0 : i64, tpu.core_type = #tpu.core_type<tc>, window_params = [{transform_indices = @transform_0, window_bounds = array<i64: 8, 128>}, {transform_indices = @transform_1, window_bounds = array<i64: 256, 128>}, {transform_indices = @transform_2, window_bounds = array<i64: 256, 128>}, {transform_indices = @transform_3, window_bounds = array<i64: 128, 256>}, {transform_indices = @transform_4, window_bounds = array<i64: 8, 128>}]} {
    %c0_i32 = arith.constant 0 : i32
    %0 = arith.cmpi eq, %arg1, %c0_i32 : i32
    %1 = arith.extui %0 : i1 to i32
    %c0_i32_0 = arith.constant 0 : i32
    %2 = arith.cmpi ne, %1, %c0_i32_0 : i32
    scf.if %2 {
      %cst_15 = arith.constant 0.000000e+00 : f32
      %20 = vector.broadcast %cst_15 : f32 to vector<8x128xf32>
      %c0_16 = arith.constant 0 : index
      %c0_17 = arith.constant 0 : index
      %21 = vector.load %arg6[%c0_16, %c0_17] : memref<8x128xf32, #tpu.memory_space<vmem>>, vector<8x128xf32>
      tpu.vector_store %arg6[%c0_16, %c0_17], %20 {strides = array<i32>} : memref<8x128xf32, #tpu.memory_space<vmem>>, vector<8x128xf32>,
    } else {
    }
    %c0 = arith.constant 0 : index
    %c0_1 = arith.constant 0 : index
    %3 = vector.load %arg2[%c0, %c0_1] : memref<8x128xf32, #tpu.memory_space<vmem>>, vector<8x128xf32>
    %c0_2 = arith.constant 0 : index
    %c0_3 = arith.constant 0 : index
    %4 = vector.load %arg3[%c0_2, %c0_3] : memref<256x128xf32, #tpu.memory_space<vmem>>, vector<256x128xf32>
    %cst = arith.constant dense<0.000000e+00> : vector<8x256xf32>
    %5 = tpu.matmul %3, %4, %cst {dimension_numbers = #tpu.dot_dimension_numbers<[1], [1], [0], [0], [0, 0, 1, 0], [], []>} : vector<8x128xf32>, vector<256x128xf32>, vector<8x256xf32> -> vector<8x256xf32>
    %c0_4 = arith.constant 0 : index
    %c0_5 = arith.constant 0 : index
    %6 = vector.load %arg4[%c0_4, %c0_5] : memref<256x128xf32, #tpu.memory_space<vmem>>, vector<256x128xf32>
    %cst_6 = arith.constant dense<0.000000e+00> : vector<8x256xf32>
    %7 = tpu.matmul %3, %6, %cst_6 {dimension_numbers = #tpu.dot_dimension_numbers<[1], [1], [0], [0], [0, 0, 1, 0], [], []>} : vector<8x128xf32>, vector<256x128xf32>, vector<8x256xf32> -> vector<8x256xf32>
    %8 = arith.negf %5 : vector<8x256xf32>
    %9 = math.exp %8 : vector<8x256xf32>
    %cst_7 = arith.constant 1.000000e+00 : f32
    %10 = vector.broadcast %cst_7 : f32 to vector<8x256xf32>
    %11 = arith.addf %10, %9 : vector<8x256xf32>
    %12 = arith.divf %10, %11 : vector<8x256xf32>
    %13 = arith.mulf %5, %12 : vector<8x256xf32>
    %14 = arith.mulf %13, %7 : vector<8x256xf32>
    %c0_8 = arith.constant 0 : index
    %c0_9 = arith.constant 0 : index
    %15 = vector.load %arg6[%c0_8, %c0_9] : memref<8x128xf32, #tpu.memory_space<vmem>>, vector<8x128xf32>
    %c0_10 = arith.constant 0 : index
    %c0_11 = arith.constant 0 : index
    %16 = vector.load %arg5[%c0_10, %c0_11] : memref<128x256xf32, #tpu.memory_space<vmem>>, vector<128x256xf32>
    %cst_12 = arith.constant dense<0.000000e+00> : vector<8x128xf32>
    %17 = tpu.matmul %14, %16, %cst_12 {dimension_numbers = #tpu.dot_dimension_numbers<[1], [1], [0], [0], [0, 0, 1, 0], [], []>} : vector<8x256xf32>, vector<128x256xf32>, vector<8x128xf32> -> vector<8x128xf32>
    %18 = arith.addf %15, %17 : vector<8x128xf32>
    %c0_13 = arith.constant 0 : index
    %c0_14 = arith.constant 0 : index
    %19 = vector.load %arg6[%c0_13, %c0_14] : memref<8x128xf32, #tpu.memory_space<vmem>>, vector<8x128xf32>
    tpu.vector_store %arg6[%c0_13, %c0_14], %18 {strides = array<i32>} : memref<8x128xf32, #tpu.memory_space<vmem>>, vector<8x128xf32>,
    return
  }
  func.func @transform_0(%arg0: i32, %arg1: i32) -> (i32, i32) {
    %c0_i32 = arith.constant 0 : i32
    %c0_i32_0 = arith.constant 0 : i32
    return %arg0, %c0_i32 : i32, i32
  }
  func.func @transform_1(%arg0: i32, %arg1: i32) -> (i32, i32) {
    %c2_i32 = arith.constant 2 : i32
    %c0_i32 = arith.constant 0 : i32
    %0 = arith.cmpi eq, %c2_i32, %c0_i32 : i32
    %c1_i32 = arith.constant 1 : i32
    %1 = arith.select %0, %c1_i32, %c2_i32 : i32
    %2 = arith.remsi %arg0, %1 : i32
    %c0_i32_0 = arith.constant 0 : i32
    %3 = arith.cmpi ne, %2, %c0_i32_0 : i32
    %c0_i32_1 = arith.constant 0 : i32
    %4 = arith.cmpi slt, %2, %c0_i32_1 : i32
    %c0_i32_2 = arith.constant 0 : i32
    %5 = arith.cmpi slt, %1, %c0_i32_2 : i32
    %6 = arith.xori %4, %5 : i1
    %7 = arith.andi %6, %3 : i1
    %8 = arith.addi %2, %1 : i32
    %9 = arith.select %7, %8, %2 : i32
    %c2_i32_3 = arith.constant 2 : i32
    %10 = arith.muli %c2_i32_3, %arg1 : i32
    %c0_i32_4 = arith.constant 0 : i32
    %11 = arith.subi %c0_i32_4, %10 : i32
    %12 = arith.muli %9, %11 : i32
    %13 = arith.addi %arg1, %12 : i32
    %c0_i32_5 = arith.constant 0 : i32
    %c0_i32_6 = arith.constant 0 : i32
    return %13, %c0_i32_5 : i32, i32
  }
  func.func @transform_2(%arg0: i32, %arg1: i32) -> (i32, i32) {
    %c2_i32 = arith.constant 2 : i32
    %c0_i32 = arith.constant 0 : i32
    %0 = arith.cmpi eq, %c2_i32, %c0_i32 : i32
    %c1_i32 = arith.constant 1 : i32
    %1 = arith.select %0, %c1_i32, %c2_i32 : i32
    %2 = arith.remsi %arg0, %1 : i32
    %c0_i32_0 = arith.constant 0 : i32
    %3 = arith.cmpi ne, %2, %c0_i32_0 : i32
    %c0_i32_1 = arith.constant 0 : i32
    %4 = arith.cmpi slt, %2, %c0_i32_1 : i32
    %c0_i32_2 = arith.constant 0 : i32
    %5 = arith.cmpi slt, %1, %c0_i32_2 : i32
    %6 = arith.xori %4, %5 : i1
    %7 = arith.andi %6, %3 : i1
    %8 = arith.addi %2, %1 : i32
    %9 = arith.select %7, %8, %2 : i32
    %c2_i32_3 = arith.constant 2 : i32
    %10 = arith.muli %c2_i32_3, %arg1 : i32
    %c0_i32_4 = arith.constant 0 : i32
    %11 = arith.subi %c0_i32_4, %10 : i32
    %12 = arith.muli %9, %11 : i32
    %13 = arith.addi %arg1, %12 : i32
    %c0_i32_5 = arith.constant 0 : i32
    %c0_i32_6 = arith.constant 0 : i32
    return %13, %c0_i32_5 : i32, i32
  }
  func.func @transform_3(%arg0: i32, %arg1: i32) -> (i32, i32) {
    %c2_i32 = arith.constant 2 : i32
    %c0_i32 = arith.constant 0 : i32
    %0 = arith.cmpi eq, %c2_i32, %c0_i32 : i32
    %c1_i32 = arith.constant 1 : i32
    %1 = arith.select %0, %c1_i32, %c2_i32 : i32
    %2 = arith.remsi %arg0, %1 : i32
    %c0_i32_0 = arith.constant 0 : i32
    %3 = arith.cmpi ne, %2, %c0_i32_0 : i32
    %c0_i32_1 = arith.constant 0 : i32
    %4 = arith.cmpi slt, %2, %c0_i32_1 : i32
    %c0_i32_2 = arith.constant 0 : i32
    %5 = arith.cmpi slt, %1, %c0_i32_2 : i32
    %6 = arith.xori %4, %5 : i1
    %7 = arith.andi %6, %3 : i1
    %8 = arith.addi %2, %1 : i32
    %9 = arith.select %7, %8, %2 : i32
    %c2_i32_3 = arith.constant 2 : i32
    %10 = arith.muli %c2_i32_3, %arg1 : i32
    %c0_i32_4 = arith.constant 0 : i32
    %11 = arith.subi %c0_i32_4, %10 : i32
    %12 = arith.muli %9, %11 : i32
    %13 = arith.addi %arg1, %12 : i32
    %c0_i32_5 = arith.constant 0 : i32
    %c0_i32_6 = arith.constant 0 : i32
    return %c0_i32_5, %13 : i32, i32
  }
  func.func @transform_4(%arg0: i32, %arg1: i32) -> (i32, i32) {
    %c0_i32 = arith.constant 0 : i32
    %c0_i32_0 = arith.constant 0 : i32
    return %arg0, %c0_i32 : i32, i32
  }
}

</mosaic_0001>

<llo_original>
// kernel: swiglu.1
$region0: #{swiglu.1}
  #allocation0 [shape = 'u32[]', space=smem, size = 0x4, offset = 0x4, fixed_abs, tag = 'smem constant byte address 0x4 - core index']
  #allocation1 [shape = 'u32[72,128]{1,0:T(1,128)}', space=vmem, size = 0x9000, scoped, tag = 'internal scratch']
  %s0 = inlined_call_operand.hbm [shape: f32[16,128], index: 0, kind: input, shape index: {}]
  %s1 = inlined_call_operand.hbm [shape: f32[256,128], index: 1, kind: input, shape index: {}]
  %s2 = inlined_call_operand.hbm [shape: f32[256,128], index: 2, kind: input, shape index: {}]
  %s3 = inlined_call_operand.hbm [shape: f32[128,256], index: 3, kind: input, shape index: {}]
  %s4 = inlined_call_operand.hbm [shape: f32[16,128], index: 4, kind: output, shape index: {}]
  %s5 = sld [smem:[#allocation0]]
  $region69: #{swiglu.1} parent=0
    _
  %s7 = ssub.s32 1, %s5
  %s8 = scalar_select 0, %s7, %s5
  $region1: #{swiglu.1} parent=0
    #allocation2 [shape = 'u8[8192]{0}', space=vmem, size = 0x2000, scoped, tag = 'input window, operand 0']
    #allocation3 [shape = 's32[2]{0}', space=sflag, size = 0x8, scoped, tag = 'scoped memory for swiglu.1']
    #allocation4 [shape = 's32[2]{0}', space=sflag, size = 0x8, scoped, tag = 'scoped memory for swiglu.1']
    #allocation5 [shape = 'u8[262144]{0}', space=vmem, size = 0x40000, scoped, tag = 'input window, operand 1']
    #allocation6 [shape = 's32[2]{0}', space=sflag, size = 0x8, scoped, tag = 'scoped memory for swiglu.1']
    #allocation7 [shape = 'u8[262144]{0}', space=vmem, size = 0x40000, scoped, tag = 'input window, operand 2']
    #allocation8 [shape = 'u8[262144]{0}', space=vmem, size = 0x40000, scoped, tag = 'input window, operand 3']
    #allocation9 [shape = 's32[2]{0}', space=sflag, size = 0x8, scoped, tag = 'scoped memory for swiglu.1']
    #allocation10 [shape = 'u8[8192]{0}', space=vmem, size = 0x2000, scoped, tag = 'output window, operand 0']
    %9 = vsyncpa [#allocation3], 0
    %s10 = scalar_lea.sflag [#allocation3], 1
    %11 = vsyncpa %s10, 0
    %12 = vsyncpa [#allocation6], 0
    %s13 = scalar_lea.sflag [#allocation6], 1
    %14 = vsyncpa %s13, 0
    %15 = vsyncpa [#allocation9], 0
    %s16 = scalar_lea.sflag [#allocation9], 1
    %17 = vsyncpa %s16, 0
    %18 = vsyncpa [#allocation4], 0
    %s19 = scalar_lea.sflag [#allocation4], 1
    %20 = vsyncpa %s19, 0
    loop: start=0, step=1, limit=4
    $region2: #{swiglu.1} parent=1 // loop_pre_header
      _
    $region3: #{swiglu.1} parent=1 // loop_header
      %s22 = sphi 0, %s26
      %p23 = scmp.ge.s32.totalorder %s22, 4
      %s29 = sphi 0, %s41
      %s30 = sphi 0, %s37
      %s31 = sphi 0, %s29
      %s32 = sphi 0, %s30
      %s33 = sphi 0, %s31
      %s34 = sphi 0, %s32
      %s44 = sphi 0, %s46
      %s47 = sphi 0, %s44
      %s48 = sphi 0, %s47
      %s64 = sphi 0, %s48
      %s102 = sphi 0, %s104
      %s105 = sphi 0, %s102
      %s106 = sphi 0, %s105
      %s122 = sphi 0, %s106
      %s160 = sphi 0, %s162
      %s163 = sphi 0, %s160
      %s164 = sphi 0, %s163
      %s180 = sphi 0, %s164
      %s218 = sphi 0, %s220
      %s221 = sphi 0, %s218
      %s222 = sphi 0, %s221
      %s238 = sphi 0, %s222
      %s244 = sphi 0, %s246
      %s247 = sphi 0, %s244
      %s248 = sphi 0, %s247
      %s264 = sphi 0, %s248
    $region4: #{swiglu.1} parent=1 // loop_header_branch
      %25 = sbr.rel (%p23) target = $region8
    $region5: #{swiglu.1} parent=1 // loop_body
      %s27 = ssub.s32 %s22, 1
      %s28 = ssub.s32 %s22, 2
      %s35 = sadd.s32 1, %s30
      %p36 = scmp.ge.s32.totalorder %s35, 1
      %s37 = scalar_select %p36, 0, %s35
      %s38 = sadd.s32 1, %s29
      %s39 = scalar_select %p36, %s38, %s29
      %p40 = scmp.ge.s32.totalorder %s39, 2
      %s41 = scalar_select %p40, 0, %s39
      %s42 = ssub.s32 %s29, %s41
      %p43 = scmp.eq.s32.totalorder %s42, 0
      %s45 = sadd.s32 %s44, 1
      %s46 = scalar_select %p43, %s44, %s45
      %p49 = pneg %p43
      %p50 = scmp.eq.s32.totalorder %s22, 1
      %p51 = por %p49, %p50
      %p52 = scmp.ne.s32.totalorder %s44, %s47
      %p53 = scmp.eq.s32.totalorder %s22, 0
      %p54 = por %p52, %p53
      %p55 = scmp.ne.s32.totalorder %s44, %s47
      %p56 = scmp.eq.s32.totalorder %s27, 1
      %p57 = por %p55, %p56
      %p58 = scmp.ne.s32.totalorder %s47, %s48
      %p59 = scmp.eq.s32.totalorder %s27, 0
      %p60 = por %p58, %p59
      %p61 = scmp.ne.s32.totalorder %s47, %s48
      %p62 = scmp.eq.s32.totalorder %s28, 1
      %p63 = por %p61, %p62
      %p65 = scmp.ne.s32.totalorder %s48, %s64
      %p66 = scmp.eq.s32.totalorder %s28, 0
      %p67 = por %p65, %p66
      %p68 = scmp.lt.s32.totalorder %s29, 0
      %s69 = ssub.s32 0, %s29
      %s70 = scalar_select %p68, %s69, %s29
      %s71 = sand.u32 %s70, 1
      %s72 = ssub.s32 0, %s71
      %s73 = scalar_select %p68, %s72, %s71
      %p74 = scmp.ne.s32.totalorder %s73, 0
      %p75 = scmp.lt.s32.totalorder %s73, 0
      %p76 = pnand %p75, %p74
      %p77 = pneg %p76
      %s78 = sadd.s32 %s73, 2
      %s79 = scalar_select %p77, %s78, %s73
      %s80 = smul.u32 %s30, 2
      %s81 = ssub.s32 0, %s80
      %s82 = smul.u32 %s79, %s81
      %s83 = sadd.s32 %s30, %s82
      %p84 = scmp.lt.s32.totalorder %s41, 0
      %s85 = ssub.s32 0, %s41
      %s86 = scalar_select %p84, %s85, %s41
      %s87 = sand.u32 %s86, 1
      %s88 = ssub.s32 0, %s87
      %s89 = scalar_select %p84, %s88, %s87
      %p90 = scmp.ne.s32.totalorder %s89, 0
      %p91 = scmp.lt.s32.totalorder %s89, 0
      %p92 = pnand %p91, %p90
      %p93 = pneg %p92
      %s94 = sadd.s32 %s89, 2
      %s95 = scalar_select %p93, %s94, %s89
      %s96 = smul.u32 %s37, 2
      %s97 = ssub.s32 0, %s96
      %s98 = smul.u32 %s95, %s97
      %s99 = sadd.s32 %s37, %s98
      %s100 = ssub.s32 %s83, %s99
      %p101 = scmp.eq.s32.totalorder %s100, 0
      %s103 = sadd.s32 %s102, 1
      %s104 = scalar_select %p101, %s102, %s103
      %p107 = pneg %p101
      %p108 = scmp.eq.s32.totalorder %s22, 1
      %p109 = por %p107, %p108
      %p110 = scmp.ne.s32.totalorder %s102, %s105
      %p111 = scmp.eq.s32.totalorder %s22, 0
      %p112 = por %p110, %p111
      %p113 = scmp.ne.s32.totalorder %s102, %s105
      %p114 = scmp.eq.s32.totalorder %s27, 1
      %p115 = por %p113, %p114
      %p116 = scmp.ne.s32.totalorder %s105, %s106
      %p117 = scmp.eq.s32.totalorder %s27, 0
      %p118 = por %p116, %p117
      %p119 = scmp.ne.s32.totalorder %s105, %s106
      %p120 = scmp.eq.s32.totalorder %s28, 1
      %p121 = por %p119, %p120
      %p123 = scmp.ne.s32.totalorder %s106, %s122
      %p124 = scmp.eq.s32.totalorder %s28, 0
      %p125 = por %p123, %p124
      %p126 = scmp.lt.s32.totalorder %s29, 0
      %s127 = ssub.s32 0, %s29
      %s128 = scalar_select %p126, %s127, %s29
      %s129 = sand.u32 %s128, 1
      %s130 = ssub.s32 0, %s129
      %s131 = scalar_select %p126, %s130, %s129
      %p132 = scmp.ne.s32.totalorder %s131, 0
      %p133 = scmp.lt.s32.totalorder %s131, 0
      %p134 = pnand %p133, %p132
      %p135 = pneg %p134
      %s136 = sadd.s32 %s131, 2
      %s137 = scalar_select %p135, %s136, %s131
      %s138 = smul.u32 %s30, 2
      %s139 = ssub.s32 0, %s138
      %s140 = smul.u32 %s137, %s139
      %s141 = sadd.s32 %s30, %s140
      %p142 = scmp.lt.s32.totalorder %s41, 0
      %s143 = ssub.s32 0, %s41
      %s144 = scalar_select %p142, %s143, %s41
      %s145 = sand.u32 %s144, 1
      %s146 = ssub.s32 0, %s145
      %s147 = scalar_select %p142, %s146, %s145
      %p148 = scmp.ne.s32.totalorder %s147, 0
      %p149 = scmp.lt.s32.totalorder %s147, 0
      %p150 = pnand %p149, %p148
      %p151 = pneg %p150
      %s152 = sadd.s32 %s147, 2
      %s153 = scalar_select %p151, %s152, %s147
      %s154 = smul.u32 %s37, 2
      %s155 = ssub.s32 0, %s154
      %s156 = smul.u32 %s153, %s155
      %s157 = sadd.s32 %s37, %s156
      %s158 = ssub.s32 %s141, %s157
      %p159 = scmp.eq.s32.totalorder %s158, 0
      %s161 = sadd.s32 %s160, 1
      %s162 = scalar_select %p159, %s160, %s161
      %p165 = pneg %p159
      %p166 = scmp.eq.s32.totalorder %s22, 1
      %p167 = por %p165, %p166
      %p168 = scmp.ne.s32.totalorder %s160, %s163
      %p169 = scmp.eq.s32.totalorder %s22, 0
      %p170 = por %p168, %p169
      %p171 = scmp.ne.s32.totalorder %s160, %s163
      %p172 = scmp.eq.s32.totalorder %s27, 1
      %p173 = por %p171, %p172
      %p174 = scmp.ne.s32.totalorder %s163, %s164
      %p175 = scmp.eq.s32.totalorder %s27, 0
      %p176 = por %p174, %p175
      %p177 = scmp.ne.s32.totalorder %s163, %s164
      %p178 = scmp.eq.s32.totalorder %s28, 1
      %p179 = por %p177, %p178
      %p181 = scmp.ne.s32.totalorder %s164, %s180
      %p182 = scmp.eq.s32.totalorder %s28, 0
      %p183 = por %p181, %p182
      %p184 = scmp.lt.s32.totalorder %s29, 0
      %s185 = ssub.s32 0, %s29
      %s186 = scalar_select %p184, %s185, %s29
      %s187 = sand.u32 %s186, 1
      %s188 = ssub.s32 0, %s187
      %s189 = scalar_select %p184, %s188, %s187
      %p190 = scmp.ne.s32.totalorder %s189, 0
      %p191 = scmp.lt.s32.totalorder %s189, 0
      %p192 = pnand %p191, %p190
      %p193 = pneg %p192
      %s194 = sadd.s32 %s189, 2
      %s195 = scalar_select %p193, %s194, %s189
      %s196 = smul.u32 %s30, 2
      %s197 = ssub.s32 0, %s196
      %s198 = smul.u32 %s195, %s197
      %s199 = sadd.s32 %s30, %s198
      %p200 = scmp.lt.s32.totalorder %s41, 0
      %s201 = ssub.s32 0, %s41
      %s202 = scalar_select %p200, %s201, %s41
      %s203 = sand.u32 %s202, 1
      %s204 = ssub.s32 0, %s203
      %s205 = scalar_select %p200, %s204, %s203
      %p206 = scmp.ne.s32.totalorder %s205, 0
      %p207 = scmp.lt.s32.totalorder %s205, 0
      %p208 = pnand %p207, %p206
      %p209 = pneg %p208
      %s210 = sadd.s32 %s205, 2
      %s211 = scalar_select %p209, %s210, %s205
      %s212 = smul.u32 %s37, 2
      %s213 = ssub.s32 0, %s212
      %s214 = smul.u32 %s211, %s213
      %s215 = sadd.s32 %s37, %s214
      %s216 = ssub.s32 %s199, %s215
      %p217 = scmp.eq.s32.totalorder %s216, 0
      %s219 = sadd.s32 %s218, 1
      %s220 = scalar_select %p217, %s218, %s219
      %p223 = pneg %p217
      %p224 = scmp.eq.s32.totalorder %s22, 1
      %p225 = por %p223, %p224
      %p226 = scmp.ne.s32.totalorder %s218, %s221
      %p227 = scmp.eq.s32.totalorder %s22, 0
      %p228 = por %p226, %p227
      %p229 = scmp.ne.s32.totalorder %s218, %s221
      %p230 = scmp.eq.s32.totalorder %s27, 1
      %p231 = por %p229, %p230
      %p232 = scmp.ne.s32.totalorder %s221, %s222
      %p233 = scmp.eq.s32.totalorder %s27, 0
      %p234 = por %p232, %p233
      %p235 = scmp.ne.s32.totalorder %s221, %s222
      %p236 = scmp.eq.s32.totalorder %s28, 1
      %p237 = por %p235, %p236
      %p239 = scmp.ne.s32.totalorder %s222, %s238
      %p240 = scmp.eq.s32.totalorder %s28, 0
      %p241 = por %p239, %p240
      %s242 = ssub.s32 %s29, %s41
      %p243 = scmp.eq.s32.totalorder %s242, 0
      %s245 = sadd.s32 %s244, 1
      %s246 = scalar_select %p243, %s244, %s245
      %p249 = pneg %p243
      %p250 = scmp.eq.s32.totalorder %s22, 1
      %p251 = por %p249, %p250
      %p252 = scmp.ne.s32.totalorder %s244, %s247
      %p253 = scmp.eq.s32.totalorder %s22, 0
      %p254 = por %p252, %p253
      %p255 = scmp.ne.s32.totalorder %s244, %s247
      %p256 = scmp.eq.s32.totalorder %s27, 1
      %p257 = por %p255, %p256
      %p258 = scmp.ne.s32.totalorder %s247, %s248
      %p259 = scmp.eq.s32.totalorder %s27, 0
      %p260 = por %p258, %p259
      %p261 = scmp.ne.s32.totalorder %s247, %s248
      %p262 = scmp.eq.s32.totalorder %s28, 1
      %p263 = por %p261, %p262
      %p265 = scmp.ne.s32.totalorder %s248, %s264
      %p266 = scmp.eq.s32.totalorder %s28, 0
      %p267 = por %p265, %p266
      %p268 = scmp.le.s32.totalorder 1, %s22
      %p269 = scmp.lt.s32.totalorder %s22, 3
      %p270 = pnand %p268, %p269
      %p271 = pneg %p270
      // Predicated region
      $region9: #{swiglu.1} parent=5 // pred_check
        _
      $region10: #{swiglu.1} parent=5 // pred_check_branch
        %273 = sbr.rel (%p270) target = $region12
      $region11: #{swiglu.1} parent=5 // pred_region
        %s274 = ssub.s32 %s22, 1
      $region12: #{swiglu.1} parent=5 // pred_fallthru
        _
      %p275 = scmp.lt.s32.totalorder %s22, 2
      // Predicated region
      $region13: #{swiglu.1} parent=5 // pred_check
        %p276 = pneg %p275
      $region14: #{swiglu.1} parent=5 // pred_check_branch
        %278 = sbr.rel (%p276) target = $region16
      $region15: #{swiglu.1} parent=5 // pred_region
        // Predicated region
        $region17: #{swiglu.1} parent=15 // pred_check
          %p279 = pneg %p54
        $region18: #{swiglu.1} parent=15 // pred_check_branch
          %281 = sbr.rel (%p279) target = $region20
        $region19: #{swiglu.1} parent=15 // pred_region
          %s282 = sand.u32 %s44, 1
          %s283 = scalar_lea.sflag [#allocation3], %s282
          %s284 = sand.u32 %s44, 1
          %s285 = smul.addr %s284, 8
          %s286 = scalar_lea.vmem [#allocation2], %s285
          %288 = vsyncadd %s283, 0
          %s289 = smul.addr %s29, 8
          %s290 = scalar_lea.hbm %s0, %s289
          %s292 = sshll.u32 %s290, 4
          %s293 = int_to_ptr.hbm [resolvable:$true] %s292
          %s294 = sshll.u32 %s286, 4
          %s295 = int_to_ptr.vmem [resolvable:$true] %s294
          %297 = dma.hbm_to_vmem [thread:$0]  %s293, 128, %s295, %s283
        $region20: #{swiglu.1} parent=15 // pred_fallthru
          _
        // Predicated region
        $region21: #{swiglu.1} parent=15 // pred_check
          %p298 = pneg %p112
        $region22: #{swiglu.1} parent=15 // pred_check_branch
          %300 = sbr.rel (%p298) target = $region24
        $region23: #{swiglu.1} parent=15 // pred_region
          %s301 = sand.u32 %s22, 1
          %s302 = scalar_lea.sflag [#allocation6], %s301
          %s303 = sand.u32 %s102, 1
          %s304 = smul.addr %s303, 256
          %s305 = scalar_lea.vmem [#allocation5], %s304
          %p306 = scmp.lt.s32.totalorder %s29, 0
          %s307 = ssub.s32 0, %s29
          %s308 = scalar_select %p306, %s307, %s29
          %s309 = sand.u32 %s308, 1
          %s310 = ssub.s32 0, %s309
          %s311 = scalar_select %p306, %s310, %s309
          %p312 = scmp.ne.s32.totalorder %s311, 0
          %p313 = scmp.lt.s32.totalorder %s311, 0
          %p314 = pnand %p313, %p312
          %p315 = pneg %p314
          %s316 = sadd.s32 %s311, 2
          %s317 = scalar_select %p315, %s316, %s311
          %s318 = smul.u32 %s30, 2
          %s319 = ssub.s32 0, %s318
          %s320 = smul.u32 %s317, %s319
          %s321 = sadd.s32 %s30, %s320
          %s322 = smul.u32 32, %s321
          %324 = vsyncadd %s302, 0
          %s325 = smul.addr %s322, 8
          %s326 = scalar_lea.hbm %s1, %s325
          %s327 = sshll.u32 %s326, 4
          %s328 = int_to_ptr.hbm [resolvable:$true] %s327
          %s329 = sshll.u32 %s305, 4
          %s330 = int_to_ptr.vmem [resolvable:$true] %s329
          %335 = dma.hbm_to_vmem [thread:$0]  %s328, 4096, %s330, %s302, 128, 128, 8
        $region24: #{swiglu.1} parent=15 // pred_fallthru
          _
        // Predicated region
        $region25: #{swiglu.1} parent=15 // pred_check
          %p336 = pneg %p170
        $region26: #{swiglu.1} parent=15 // pred_check_branch
          %338 = sbr.rel (%p336) target = $region28
        $region27: #{swiglu.1} parent=15 // pred_region
          %s339 = sand.u32 %s22, 1
          %s340 = scalar_lea.sflag [#allocation6], %s339
          %s341 = sand.u32 %s160, 1
          %s342 = smul.addr %s341, 256
          %s343 = scalar_lea.vmem [#allocation7], %s342
          %p344 = scmp.lt.s32.totalorder %s29, 0
          %s345 = ssub.s32 0, %s29
          %s346 = scalar_select %p344, %s345, %s29
          %s347 = sand.u32 %s346, 1
          %s348 = ssub.s32 0, %s347
          %s349 = scalar_select %p344, %s348, %s347
          %p350 = scmp.ne.s32.totalorder %s349, 0
          %p351 = scmp.lt.s32.totalorder %s349, 0
          %p352 = pnand %p351, %p350
          %p353 = pneg %p352
          %s354 = sadd.s32 %s349, 2
          %s355 = scalar_select %p353, %s354, %s349
          %s356 = smul.u32 %s30, 2
          %s357 = ssub.s32 0, %s356
          %s358 = smul.u32 %s355, %s357
          %s359 = sadd.s32 %s30, %s358
          %s360 = smul.u32 32, %s359
          %362 = vsyncadd %s340, 0
          %s363 = smul.addr %s360, 8
          %s364 = scalar_lea.hbm %s2, %s363
          %s365 = sshll.u32 %s364, 4
          %s366 = int_to_ptr.hbm [resolvable:$true] %s365
          %s367 = sshll.u32 %s343, 4
          %s368 = int_to_ptr.vmem [resolvable:$true] %s367
          %373 = dma.hbm_to_vmem [thread:$0]  %s366, 4096, %s368, %s340, 128, 128, 8
        $region28: #{swiglu.1} parent=15 // pred_fallthru
          _
        // Predicated region
        $region29: #{swiglu.1} parent=15 // pred_check
          %p374 = pneg %p228
        $region30: #{swiglu.1} parent=15 // pred_check_branch
          %376 = sbr.rel (%p374) target = $region32
        $region31: #{swiglu.1} parent=15 // pred_region
          %s377 = sand.u32 %s218, 1
          %s378 = scalar_lea.sflag [#allocation9], %s377
          %s379 = sand.u32 %s218, 1
          %s380 = smul.addr %s379, 256
          %s381 = scalar_lea.vmem [#allocation8], %s380
          %p382 = scmp.lt.s32.totalorder %s29, 0
          %s383 = ssub.s32 0, %s29
          %s384 = scalar_select %p382, %s383, %s29
          %s385 = sand.u32 %s384, 1
          %s386 = ssub.s32 0, %s385
          %s387 = scalar_select %p382, %s386, %s385
          %p388 = scmp.ne.s32.totalorder %s387, 0
          %p389 = scmp.lt.s32.totalorder %s387, 0
          %p390 = pnand %p389, %p388
          %p391 = pneg %p390
          %s392 = sadd.s32 %s387, 2
          %s393 = scalar_select %p391, %s392, %s387
          %s394 = smul.u32 %s30, 2
          %s395 = ssub.s32 0, %s394
          %s396 = smul.u32 %s393, %s395
          %s397 = sadd.s32 %s30, %s396
          %s398 = smul.u32 2, %s397
          %400 = vsyncadd %s378, 0
          %s401 = smul.addr %s398, 8
          %s402 = scalar_lea.hbm %s3, %s401
          %s403 = sshll.u32 %s402, 4
          %s404 = int_to_ptr.hbm [resolvable:$true] %s403
          %s405 = sshll.u32 %s381, 4
          %s406 = int_to_ptr.vmem [resolvable:$true] %s405
          %411 = dma.hbm_to_vmem [thread:$0]  %s404, 4096, %s406, %s378, 256, 256, 16
        $region32: #{swiglu.1} parent=15 // pred_fallthru
          _
      $region16: #{swiglu.1} parent=5 // pred_fallthru
        _
      %p412 = scmp.le.s32.totalorder 1, %s22
      %p413 = scmp.lt.s32.totalorder %s22, 3
      %p414 = pnand %p412, %p413
      %p415 = pneg %p414
      // Predicated region
      $region33: #{swiglu.1} parent=5 // pred_check
        _
      $region34: #{swiglu.1} parent=5 // pred_check_branch
        %417 = sbr.rel (%p414) target = $region36
      $region35: #{swiglu.1} parent=5 // pred_region
        %s418 = ssub.s32 %s22, 1
        %s419 = sand.u32 %s47, 1
        %s420 = scalar_lea.sflag [#allocation3], %s419
        %s421 = sand.u32 %s47, 1
        %s422 = smul.addr %s421, 8
        %s423 = scalar_lea.vmem [#allocation2], %s422
        // Predicated region
        $region37: #{swiglu.1} parent=35 // pred_check
          %p424 = pneg %p60
        $region38: #{swiglu.1} parent=35 // pred_check_branch
          %426 = sbr.rel (%p424) target = $region40
        $region39: #{swiglu.1} parent=35 // pred_region
          %428 = dma.done %s420, 128
        $region40: #{swiglu.1} parent=35 // pred_fallthru
          _
        %s429 = sand.u32 %s27, 1
        %s430 = scalar_lea.sflag [#allocation6], %s429
        %s431 = sand.u32 %s105, 1
        %s432 = smul.addr %s431, 256
        %s433 = scalar_lea.vmem [#allocation5], %s432
        // Predicated region
        $region41: #{swiglu.1} parent=35 // pred_check
          %p434 = pneg %p118
        $region42: #{swiglu.1} parent=35 // pred_check_branch
          %436 = sbr.rel (%p434) target = $region44
        $region43: #{swiglu.1} parent=35 // pred_region
          %438 = dma.done %s430, 4096
        $region44: #{swiglu.1} parent=35 // pred_fallthru
          _
        %s439 = sand.u32 %s27, 1
        %s440 = scalar_lea.sflag [#allocation6], %s439
        %s441 = sand.u32 %s163, 1
        %s442 = smul.addr %s441, 256
        %s443 = scalar_lea.vmem [#allocation7], %s442
        // Predicated region
        $region45: #{swiglu.1} parent=35 // pred_check
          %p444 = pneg %p176
        $region46: #{swiglu.1} parent=35 // pred_check_branch
          %446 = sbr.rel (%p444) target = $region48
        $region47: #{swiglu.1} parent=35 // pred_region
          %448 = dma.done %s440, 4096
        $region48: #{swiglu.1} parent=35 // pred_fallthru
          _
        %s449 = sand.u32 %s221, 1
        %s450 = scalar_lea.sflag [#allocation9], %s449
        %s451 = sand.u32 %s221, 1
        %s452 = smul.addr %s451, 256
        %s453 = scalar_lea.vmem [#allocation8], %s452
        // Predicated region
        $region49: #{swiglu.1} parent=35 // pred_check
          %p454 = pneg %p234
        $region50: #{swiglu.1} parent=35 // pred_check_branch
          %456 = sbr.rel (%p454) target = $region52
        $region51: #{swiglu.1} parent=35 // pred_region
          %458 = dma.done %s450, 4096
        $region52: #{swiglu.1} parent=35 // pred_fallthru
          _
        %s459 = sand.u32 %s47, 1
        %s460 = scalar_lea.sflag [#allocation3], %s459
        %s461 = sand.u32 %s47, 1
        %s462 = smul.addr %s461, 8
        %s463 = scalar_lea.vmem [#allocation2], %s462
        %p464 = pneg %p60
        %p465 = pneg %p57
        %s466 = sand.u32 %s27, 1
        %s467 = scalar_lea.sflag [#allocation6], %s466
        %s468 = sand.u32 %s105, 1
        %s469 = smul.addr %s468, 256
        %s470 = scalar_lea.vmem [#allocation5], %s469
        %p471 = pneg %p118
        %p472 = pneg %p115
        %s473 = sand.u32 %s27, 1
        %s474 = scalar_lea.sflag [#allocation6], %s473
        %s475 = sand.u32 %s163, 1
        %s476 = smul.addr %s475, 256
        %s477 = scalar_lea.vmem [#allocation7], %s476
        %p478 = pneg %p176
        %p479 = pneg %p173
        %s480 = sand.u32 %s221, 1
        %s481 = scalar_lea.sflag [#allocation9], %s480
        %s482 = sand.u32 %s221, 1
        %s483 = smul.addr %s482, 256
        %s484 = scalar_lea.vmem [#allocation8], %s483
        %p485 = pneg %p234
        %p486 = pneg %p231
        %p487 = pneg %p260
        %p488 = pneg %p257
        %s489 = sand.u32 %s247, 1
        %s490 = scalar_lea.sflag [#allocation4], %s489
        %s491 = sand.u32 %s247, 1
        %s492 = smul.addr %s491, 8
        %s493 = scalar_lea.vmem [#allocation10], %s492
        %p494 = scmp.lt.s32.totalorder %s31, 0
        %s495 = ssub.s32 0, %s31
        %s496 = scalar_select %p494, %s495, %s31
        %s497 = sand.u32 %s496, 1
        %s498 = ssub.s32 0, %s497
        %s499 = scalar_select %p494, %s498, %s497
        %p500 = scmp.ne.s32.totalorder %s499, 0
        %p501 = scmp.lt.s32.totalorder %s499, 0
        %p502 = pnand %p501, %p500
        %p503 = pneg %p502
        %s504 = sadd.s32 %s499, 2
        %s505 = scalar_select %p503, %s504, %s499
        %s506 = smul.u32 %s32, 2
        %s507 = ssub.s32 0, %s506
        %s508 = smul.u32 %s505, %s507
        %s509 = sadd.s32 %s32, %s508
        %s510 = smul.u32 32, %s509
        %p511 = scmp.lt.s32.totalorder %s31, 0
        %s512 = ssub.s32 0, %s31
        %s513 = scalar_select %p511, %s512, %s31
        %s514 = sand.u32 %s513, 1
        %s515 = ssub.s32 0, %s514
        %s516 = scalar_select %p511, %s515, %s514
        %p517 = scmp.ne.s32.totalorder %s516, 0
        %p518 = scmp.lt.s32.totalorder %s516, 0
        %p519 = pnand %p518, %p517
        %p520 = pneg %p519
        %s521 = sadd.s32 %s516, 2
        %s522 = scalar_select %p520, %s521, %s516
        %s523 = smul.u32 %s32, 2
        %s524 = ssub.s32 0, %s523
        %s525 = smul.u32 %s522, %s524
        %s526 = sadd.s32 %s32, %s525
        %s527 = smul.u32 32, %s526
        %p528 = scmp.lt.s32.totalorder %s31, 0
        %s529 = ssub.s32 0, %s31
        %s530 = scalar_select %p528, %s529, %s31
        %s531 = sand.u32 %s530, 1
        %s532 = ssub.s32 0, %s531
        %s533 = scalar_select %p528, %s532, %s531
        %p534 = scmp.ne.s32.totalorder %s533, 0
        %p535 = scmp.lt.s32.totalorder %s533, 0
        %p536 = pnand %p535, %p534
        %p537 = pneg %p536
        %s538 = sadd.s32 %s533, 2
        %s539 = scalar_select %p537, %s538, %s533
        %s540 = smul.u32 %s32, 2
        %s541 = ssub.s32 0, %s540
        %s542 = smul.u32 %s539, %s541
        %s543 = sadd.s32 %s32, %s542
        %s544 = smul.u32 2, %s543
        %p545 = scmp.eq.s32.totalorder %s32, 0
        // Predicated region
        $region53: #{swiglu.1} parent=35 // pred_check
          %p546 = pneg %p545
        $region54: #{swiglu.1} parent=35 // pred_check_branch
          %548 = sbr.rel (%p546) target = $region56
        $region55: #{swiglu.1} parent=35 // pred_region
          %549 = vst [vmem:[%s493] sm:$0xff] 0.0
        $region56: #{swiglu.1} parent=35 // pred_fallthru
          _
        %v550 = vld [vmem:[%s423] sm:$0xff]
        %v551 = vld [vmem:[%s433] sm:$0xff]
        %v552 = vld [vmem:[%s433 + $0x8] sm:$0xff]
        %v553 = vld [vmem:[%s433 + $0x10] sm:$0xff]
        %v554 = vld [vmem:[%s433 + $0x18] sm:$0xff]
        %v555 = vld [vmem:[%s433 + $0x20] sm:$0xff]
        %v556 = vld [vmem:[%s433 + $0x28] sm:$0xff]
        %v557 = vld [vmem:[%s433 + $0x30] sm:$0xff]
        %v558 = vld [vmem:[%s433 + $0x38] sm:$0xff]
        %v559 = vld [vmem:[%s433 + $0x40] sm:$0xff]
        %v560 = vld [vmem:[%s433 + $0x48] sm:$0xff]
        %v561 = vld [vmem:[%s433 + $0x50] sm:$0xff]
        %v562 = vld [vmem:[%s433 + $0x58] sm:$0xff]
        %v563 = vld [vmem:[%s433 + $0x60] sm:$0xff]
        %v564 = vld [vmem:[%s433 + $0x68] sm:$0xff]
        %v565 = vld [vmem:[%s433 + $0x70] sm:$0xff]
        %v566 = vld [vmem:[%s433 + $0x78] sm:$0xff]
        %v567 = vld [vmem:[%s433 + $0x80] sm:$0xff]
        %v568 = vld [vmem:[%s433 + $0x88] sm:$0xff]
        %v569 = vld [vmem:[%s433 + $0x90] sm:$0xff]
        %v570 = vld [vmem:[%s433 + $0x98] sm:$0xff]
        %v571 = vld [vmem:[%s433 + $0xa0] sm:$0xff]
        %v572 = vld [vmem:[%s433 + $0xa8] sm:$0xff]
        %v573 = vld [vmem:[%s433 + $0xb0] sm:$0xff]
        %v574 = vld [vmem:[%s433 + $0xb8] sm:$0xff]
        %v575 = vld [vmem:[%s433 + $0xc0] sm:$0xff]
        %v576 = vld [vmem:[%s433 + $0xc8] sm:$0xff]
        %v577 = vld [vmem:[%s433 + $0xd0] sm:$0xff]
        %v578 = vld [vmem:[%s433 + $0xd8] sm:$0xff]
        %v579 = vld [vmem:[%s433 + $0xe0] sm:$0xff]
        %v580 = vld [vmem:[%s433 + $0xe8] sm:$0xff]
        %v581 = vld [vmem:[%s433 + $0xf0] sm:$0xff]
        %v582 = vld [vmem:[%s433 + $0xf8] sm:$0xff]
        %583 = vmatpush.xpose.msra.mxu0 %v566
        %584 = vmatpush.xpose.msra.mxu0 %v565
        %585 = vmatpush.xpose.msra.mxu0 %v564
        %586 = vmatpush.xpose.msra.mxu0 %v563
        %587 = vmatpush.xpose.msra.mxu0 %v562
        %588 = vmatpush.xpose.msra.mxu0 %v561
        %589 = vmatpush.xpose.msra.mxu0 %v560
        %590 = vmatpush.xpose.msra.mxu0 %v559
        %591 = vmatpush.xpose.msra.mxu0 %v558
        %592 = vmatpush.xpose.msra.mxu0 %v557
        %593 = vmatpush.xpose.msra.mxu0 %v556
        %594 = vmatpush.xpose.msra.mxu0 %v555
        %595 = vmatpush.xpose.msra.mxu0 %v554
        %596 = vmatpush.xpose.msra.mxu0 %v553
        %597 = vmatpush.xpose.msra.mxu0 %v552
        %598 = vmatpush.xpose.msra.mxu0 %v551
        %599 = vmatmul.f32.gmra.mxu0 %v550
        %v600 = vpop.f32.mrf.mxu0
        %v601 = vadd.f32 0.0, %v600
        %602 = vdwg.mxu0
        %603 = vmatpush.xpose.msra.mxu0 %v582
        %604 = vmatpush.xpose.msra.mxu0 %v581
        %605 = vmatpush.xpose.msra.mxu0 %v580
        %606 = vmatpush.xpose.msra.mxu0 %v579
        %607 = vmatpush.xpose.msra.mxu0 %v578
        %608 = vmatpush.xpose.msra.mxu0 %v577
        %609 = vmatpush.xpose.msra.mxu0 %v576
        %610 = vmatpush.xpose.msra.mxu0 %v575
        %611 = vmatpush.xpose.msra.mxu0 %v574
        %612 = vmatpush.xpose.msra.mxu0 %v573
        %613 = vmatpush.xpose.msra.mxu0 %v572
        %614 = vmatpush.xpose.msra.mxu0 %v571
        %615 = vmatpush.xpose.msra.mxu0 %v570
        %616 = vmatpush.xpose.msra.mxu0 %v569
        %617 = vmatpush.xpose.msra.mxu0 %v568
        %618 = vmatpush.xpose.msra.mxu0 %v567
        %619 = vmatmul.f32.gmra.mxu0 %v550
        %v620 = vpop.f32.mrf.mxu0
        %v621 = vadd.f32 0.0, %v620
        %622 = vdwg.mxu0
        %v623 = vld [vmem:[%s443] sm:$0xff]
        %v624 = vld [vmem:[%s443 + $0x8] sm:$0xff]
        %v625 = vld [vmem:[%s443 + $0x10] sm:$0xff]
        %v626 = vld [vmem:[%s443 + $0x18] sm:$0xff]
        %v627 = vld [vmem:[%s443 + $0x20] sm:$0xff]
        %v628 = vld [vmem:[%s443 + $0x28] sm:$0xff]
        %v629 = vld [vmem:[%s443 + $0x30] sm:$0xff]
        %v630 = vld [vmem:[%s443 + $0x38] sm:$0xff]
        %v631 = vld [vmem:[%s443 + $0x40] sm:$0xff]
        %v632 = vld [vmem:[%s443 + $0x48] sm:$0xff]
        %v633 = vld [vmem:[%s443 + $0x50] sm:$0xff]
        %v634 = vld [vmem:[%s443 + $0x58] sm:$0xff]
        %v635 = vld [vmem:[%s443 + $0x60] sm:$0xff]
        %v636 = vld [vmem:[%s443 + $0x68] sm:$0xff]
        %v637 = vld [vmem:[%s443 + $0x70] sm:$0xff]
        %v638 = vld [vmem:[%s443 + $0x78] sm:$0xff]
        %v639 = vld [vmem:[%s443 + $0x80] sm:$0xff]
        %v640 = vld [vmem:[%s443 + $0x88] sm:$0xff]
        %v641 = vld [vmem:[%s443 + $0x90] sm:$0xff]
        %v642 = vld [vmem:[%s443 + $0x98] sm:$0xff]
        %v643 = vld [vmem:[%s443 + $0xa0] sm:$0xff]
        %v644 = vld [vmem:[%s443 + $0xa8] sm:$0xff]
        %v645 = vld [vmem:[%s443 + $0xb0] sm:$0xff]
        %v646 = vld [vmem:[%s443 + $0xb8] sm:$0xff]
        %v647 = vld [vmem:[%s443 + $0xc0] sm:$0xff]
        %v648 = vld [vmem:[%s443 + $0xc8] sm:$0xff]
        %v649 = vld [vmem:[%s443 + $0xd0] sm:$0xff]
        %v650 = vld [vmem:[%s443 + $0xd8] sm:$0xff]
        %v651 = vld [vmem:[%s443 + $0xe0] sm:$0xff]
        %v652 = vld [vmem:[%s443 + $0xe8] sm:$0xff]
        %v653 = vld [vmem:[%s443 + $0xf0] sm:$0xff]
        %v654 = vld [vmem:[%s443 + $0xf8] sm:$0xff]
        %655 = vmatpush.xpose.msra.mxu0 %v638
        %656 = vmatpush.xpose.msra.mxu0 %v637
        %657 = vmatpush.xpose.msra.mxu0 %v636
        %658 = vmatpush.xpose.msra.mxu0 %v635
        %659 = vmatpush.xpose.msra.mxu0 %v634
        %660 = vmatpush.xpose.msra.mxu0 %v633
        %661 = vmatpush.xpose.msra.mxu0 %v632
        %662 = vmatpush.xpose.msra.mxu0 %v631
        %663 = vmatpush.xpose.msra.mxu0 %v630
        %664 = vmatpush.xpose.msra.mxu0 %v629
        %665 = vmatpush.xpose.msra.mxu0 %v628
        %666 = vmatpush.xpose.msra.mxu0 %v627
        %667 = vmatpush.xpose.msra.mxu0 %v626
        %668 = vmatpush.xpose.msra.mxu0 %v625
        %669 = vmatpush.xpose.msra.mxu0 %v624
        %670 = vmatpush.xpose.msra.mxu0 %v623
        %671 = vmatmul.f32.gmra.mxu0 %v550
        %v672 = vpop.f32.mrf.mxu0
        %v673 = vadd.f32 0.0, %v672
        %674 = vdwg.mxu0
        %675 = vmatpush.xpose.msra.mxu0 %v654
        %676 = vmatpush.xpose.msra.mxu0 %v653
        %677 = vmatpush.xpose.msra.mxu0 %v652
        %678 = vmatpush.xpose.msra.mxu0 %v651
        %679 = vmatpush.xpose.msra.mxu0 %v650
        %680 = vmatpush.xpose.msra.mxu0 %v649
        %681 = vmatpush.xpose.msra.mxu0 %v648
        %682 = vmatpush.xpose.msra.mxu0 %v647
        %683 = vmatpush.xpose.msra.mxu0 %v646
        %684 = vmatpush.xpose.msra.mxu0 %v645
        %685 = vmatpush.xpose.msra.mxu0 %v644
        %686 = vmatpush.xpose.msra.mxu0 %v643
        %687 = vmatpush.xpose.msra.mxu0 %v642
        %688 = vmatpush.xpose.msra.mxu0 %v641
        %689 = vmatpush.xpose.msra.mxu0 %v640
        %690 = vmatpush.xpose.msra.mxu0 %v639
        %691 = vmatmul.f32.gmra.mxu0 %v550
        %v692 = vpop.f32.mrf.mxu0
        %v693 = vadd.f32 0.0, %v692
        %694 = vdwg.mxu0
        %v695 = vxor.u32 %v601, 2147483648
        %v696 = vxor.u32 %v621, 2147483648
        %v697 = vmul.f32 %v695, 1.442695
        %v698 = vpow.pop %v697
        %v699 = vmul.f32 %v696, 1.442695
        %v700 = vpow.pop %v699
        %v701 = vadd.f32 %v698, 1.0
        %v702 = vadd.f32 %v700, 1.0
        %v703 = vrcp.pop %v701
        %v704 = vmul.f32 %v701, %v703
        %v705 = vsub.f32 1.0, %v704
        %v706 = vmul.f32 %v703, %v705
        %v707 = vadd.f32 %v703, %v706
        %vm708 = vweird.f32 %v701
        %vm709 = vweird.f32 %v703
        %vm710 = vmor %vm708, %vm709
        %v711 = vsel %vm710, %v703, %v707
        %v712 = vand.u32 2147483647, %v701
        %vm713 = vcmp.eq.f32.partialorder %v712, 8.507059e+37
        %v714 = vand.u32 %v701, 2147483648
        %v715 = vor.u32 1.1754944e-38, %v714
        %v716 = vsel %vm713, %v715, %v711
        %v717 = vmul.f32 1.0, %v716
        %v718 = vrcp.pop %v702
        %v719 = vmul.f32 %v702, %v718
        %v720 = vsub.f32 1.0, %v719
        %v721 = vmul.f32 %v718, %v720
        %v722 = vadd.f32 %v718, %v721
        %vm723 = vweird.f32 %v702
        %vm724 = vweird.f32 %v718
        %vm725 = vmor %vm723, %vm724
        %v726 = vsel %vm725, %v718, %v722
        %v727 = vand.u32 2147483647, %v702
        %vm728 = vcmp.eq.f32.partialorder %v727, 8.507059e+37
        %v729 = vand.u32 %v702, 2147483648
        %v730 = vor.u32 1.1754944e-38, %v729
        %v731 = vsel %vm728, %v730, %v726
        %v732 = vmul.f32 1.0, %v731
        %v733 = vmul.f32 %v601, %v717
        %v734 = vmul.f32 %v621, %v732
        %v735 = vmul.f32 %v733, %v673
        %v736 = vmul.f32 %v734, %v693
        %v737 = vld [vmem:[%s493] sm:$0xff]
        %v738 = vld [vmem:[%s453] sm:$0xff]
        %v739 = vld [vmem:[%s453 + $0x8] sm:$0xff]
        %v740 = vld [vmem:[%s453 + $0x10] sm:$0xff]
        %v741 = vld [vmem:[%s453 + $0x18] sm:$0xff]
        %v742 = vld [vmem:[%s453 + $0x20] sm:$0xff]
        %v743 = vld [vmem:[%s453 + $0x28] sm:$0xff]
        %v744 = vld [vmem:[%s453 + $0x30] sm:$0xff]
        %v745 = vld [vmem:[%s453 + $0x38] sm:$0xff]
        %v746 = vld [vmem:[%s453 + $0x40] sm:$0xff]
        %v747 = vld [vmem:[%s453 + $0x48] sm:$0xff]
        %v748 = vld [vmem:[%s453 + $0x50] sm:$0xff]
        %v749 = vld [vmem:[%s453 + $0x58] sm:$0xff]
        %v750 = vld [vmem:[%s453 + $0x60] sm:$0xff]
        %v751 = vld [vmem:[%s453 + $0x68] sm:$0xff]
        %v752 = vld [vmem:[%s453 + $0x70] sm:$0xff]
        %v753 = vld [vmem:[%s453 + $0x78] sm:$0xff]
        %v754 = vld [vmem:[%s453 + $0x80] sm:$0xff]
        %v755 = vld [vmem:[%s453 + $0x88] sm:$0xff]
        %v756 = vld [vmem:[%s453 + $0x90] sm:$0xff]
        %v757 = vld [vmem:[%s453 + $0x98] sm:$0xff]
        %v758 = vld [vmem:[%s453 + $0xa0] sm:$0xff]
        %v759 = vld [vmem:[%s453 + $0xa8] sm:$0xff]
        %v760 = vld [vmem:[%s453 + $0xb0] sm:$0xff]
        %v761 = vld [vmem:[%s453 + $0xb8] sm:$0xff]
        %v762 = vld [vmem:[%s453 + $0xc0] sm:$0xff]
        %v763 = vld [vmem:[%s453 + $0xc8] sm:$0xff]
        %v764 = vld [vmem:[%s453 + $0xd0] sm:$0xff]
        %v765 = vld [vmem:[%s453 + $0xd8] sm:$0xff]
        %v766 = vld [vmem:[%s453 + $0xe0] sm:$0xff]
        %v767 = vld [vmem:[%s453 + $0xe8] sm:$0xff]
        %v768 = vld [vmem:[%s453 + $0xf0] sm:$0xff]
        %v769 = vld [vmem:[%s453 + $0xf8] sm:$0xff]
        %770 = vmatpush.xpose.msra.mxu0 %v768
        %771 = vmatpush.xpose.msra.mxu0 %v766
        %772 = vmatpush.xpose.msra.mxu0 %v764
        %773 = vmatpush.xpose.msra.mxu0 %v762
        %774 = vmatpush.xpose.msra.mxu0 %v760
        %775 = vmatpush.xpose.msra.mxu0 %v758
        %776 = vmatpush.xpose.msra.mxu0 %v756
        %777 = vmatpush.xpose.msra.mxu0 %v754
        %778 = vmatpush.xpose.msra.mxu0 %v752
        %779 = vmatpush.xpose.msra.mxu0 %v750
        %780 = vmatpush.xpose.msra.mxu0 %v748
        %781 = vmatpush.xpose.msra.mxu0 %v746
        %782 = vmatpush.xpose.msra.mxu0 %v744
        %783 = vmatpush.xpose.msra.mxu0 %v742
        %784 = vmatpush.xpose.msra.mxu0 %v740
        %785 = vmatpush.xpose.msra.mxu0 %v738
        %786 = vmatmul.f32.gmra.mxu0 %v735
        %v787 = vpop.f32.mrf.mxu0
        %v788 = vadd.f32 0.0, %v787
        %789 = vdwg.mxu0
        %790 = vmatpush.xpose.msra.mxu0 %v769
        %791 = vmatpush.xpose.msra.mxu0 %v767
        %792 = vmatpush.xpose.msra.mxu0 %v765
        %793 = vmatpush.xpose.msra.mxu0 %v763
        %794 = vmatpush.xpose.msra.mxu0 %v761
        %795 = vmatpush.xpose.msra.mxu0 %v759
        %796 = vmatpush.xpose.msra.mxu0 %v757
        %797 = vmatpush.xpose.msra.mxu0 %v755
        %798 = vmatpush.xpose.msra.mxu0 %v753
        %799 = vmatpush.xpose.msra.mxu0 %v751
        %800 = vmatpush.xpose.msra.mxu0 %v749
        %801 = vmatpush.xpose.msra.mxu0 %v747
        %802 = vmatpush.xpose.msra.mxu0 %v745
        %803 = vmatpush.xpose.msra.mxu0 %v743
        %804 = vmatpush.xpose.msra.mxu0 %v741
        %805 = vmatpush.xpose.msra.mxu0 %v739
        %806 = vmatmul.f32.gmra.mxu0 %v736
        %v807 = vpop.f32.mrf.mxu0
        %v808 = vadd.f32 %v788, %v807
        %809 = vdwg.mxu0
        %v810 = vadd.f32 %v737, %v808
        %811 = vst [vmem:[%s493] sm:$0xff] %v810
        %s812 = sand.u32 %s247, 1
        %s813 = scalar_lea.sflag [#allocation4], %s812
        %s814 = sand.u32 %s247, 1
        %s815 = smul.addr %s814, 8
        %s816 = scalar_lea.vmem [#allocation10], %s815
        // Predicated region
        $region57: #{swiglu.1} parent=35 // pred_check
          %p817 = pneg %p257
        $region58: #{swiglu.1} parent=35 // pred_check_branch
          %819 = sbr.rel (%p817) target = $region60
        $region59: #{swiglu.1} parent=35 // pred_region
          %821 = vsyncadd %s813, 0
          %s822 = smul.addr %s31, 8
          %s823 = scalar_lea.hbm %s4, %s822
          %s825 = sshll.u32 %s816, 4
          %s826 = int_to_ptr.vmem [resolvable:$true] %s825
          %s827 = sshll.u32 %s823, 4
          %s828 = int_to_ptr.hbm [resolvable:$true] %s827
          %830 = dma.vmem_to_hbm [thread:$0]  %s826, 128, %s828, %s813
        $region60: #{swiglu.1} parent=35 // pred_fallthru
          _
      $region36: #{swiglu.1} parent=5 // pred_fallthru
        _
      %p831 = scmp.le.s32.totalorder 2, %s22
      // Predicated region
      $region61: #{swiglu.1} parent=5 // pred_check
        %p832 = pneg %p831
      $region62: #{swiglu.1} parent=5 // pred_check_branch
        %834 = sbr.rel (%p832) target = $region64
      $region63: #{swiglu.1} parent=5 // pred_region
        %s835 = ssub.s32 %s22, 2
        // Predicated region
        $region65: #{swiglu.1} parent=63 // pred_check
          %p836 = pneg %p263
        $region66: #{swiglu.1} parent=63 // pred_check_branch
          %838 = sbr.rel (%p836) target = $region68
        $region67: #{swiglu.1} parent=63 // pred_region
          %s839 = sand.u32 %s248, 1
          %s840 = scalar_lea.sflag [#allocation4], %s839
          %s841 = sand.u32 %s248, 1
          %s842 = smul.addr %s841, 8
          %s843 = scalar_lea.vmem [#allocation10], %s842
          %845 = dma.done %s840, 128
        $region68: #{swiglu.1} parent=63 // pred_fallthru
          _
      $region64: #{swiglu.1} parent=5 // pred_fallthru
        _
    $region6: #{swiglu.1} parent=1 // loop_footer
      %s26 = sadd.s32 1, %s22
    $region7: #{swiglu.1} parent=1 // loop_footer_branch
      %21 = sbr.rel target = $region3
    $region8: #{swiglu.1} parent=1 // loop_exit
      _
    %846 = vsyncpa [#allocation3], 1
    %s847 = scalar_lea.sflag [#allocation3], 1
    %848 = vsyncpa %s847, 1
    %849 = vsyncpa [#allocation6], 1
    %s850 = scalar_lea.sflag [#allocation6], 1
    %851 = vsyncpa %s850, 1
    %852 = vsyncpa [#allocation9], 1
    %s853 = scalar_lea.sflag [#allocation9], 1
    %854 = vsyncpa %s853, 1
    %855 = vsyncpa [#allocation4], 1
    %s856 = scalar_lea.sflag [#allocation4], 1
    %857 = vsyncpa %s856, 1

</llo_original>
